<compile_context>
chip_gen: v5e
topology: v5e:2x2
jax: 0.10.0
libtpu: 0.0.40
codegen_flags: <defaults>
</compile_context>

<pallas_src>
import functools

import jax
import jax.numpy as jnp
from jax.experimental import pallas as pl
from jax.experimental.pallas import tpu as pltpu


def _round_up(x, m):
    return ((x + m - 1) // m) * m


# -----------------------------------------------------------------------------
# Fused kernel: conv stack + flatten + linear, one invocation for the batch.
# Activation layout: channels-last slab a[b*P + l, c] = act[b, c, l] in vregs.
# -----------------------------------------------------------------------------
def _fused_kernel(*refs, n_conv, k, hidden, P, B, L_f, n_out, out_pad):
    x_ref = refs[0]                          # (M, 1)     padded input column
    w0_ref = refs[1]                         # (1, k*H)   layer-0 packed weight
    b0_ref = refs[2]                         # (1, H)
    conv_refs = refs[3:3 + 2 * (n_conv - 1)]
    v_ref = refs[3 + 2 * (n_conv - 1)]       # (H, L_f*n_out) packed lin weight
    lb_ref = refs[4 + 2 * (n_conv - 1)]      # (1, n_out)
    o_ref = refs[5 + 2 * (n_conv - 1)]       # (B, n_out + out_pad)

    H = hidden
    M = B * P

    def tap_sum(y, ntaps, width):
        # z[i, :] = sum_j y[i + j, j*width:(j+1)*width]
        # Shift "read row i+j" is a sublane rotation (XLU); wrap-around only
        # touches rows that never feed valid outputs (see wrapper asserts).
        z = y[:, 0:width]
        for j in range(1, ntaps):
            z = z + pltpu.roll(y[:, j * width:(j + 1) * width],
                               shift=M - j, axis=0)
        return z

    # ---- layer 0 (C_in == 1): VPU broadcast multiply, no MXU ---------------
    y0 = x_ref[...] * w0_ref[...]                       # (M,1)*(1,kH) -> (M,kH)
    a = jnp.maximum(tap_sum(y0, k, H) + b0_ref[...], 0.0)   # dropout p=0 == id

    # ---- hidden conv layers: one lane-packed MXU matmul per layer ----------
    for li in range(n_conv - 1):
        w_ref = conv_refs[2 * li]                       # (H, k*H)
        b_ref = conv_refs[2 * li + 1]                   # (1, H)
        y = jnp.dot(a, w_ref[...], preferred_element_type=jnp.float32)
        a = jnp.maximum(tap_sum(y, k, H) + b_ref[...], 0.0)

    # ---- flatten (channel-major, folded into V2) + linear: one matmul ------
    y_lin = jnp.dot(a, v_ref[...], preferred_element_type=jnp.float32)
    z = tap_sum(y_lin, L_f, n_out)          # z[b*P, :] = linear output for b

    rows = [z[b * P:b * P + 1, :] for b in range(B)]    # 8-aligned row reads
    out = jnp.concatenate(rows, axis=0) + lb_ref[...]   # (B, n_out)
    if out_pad:
        out = jnp.concatenate(
            [out, jnp.zeros((B, out_pad), jnp.float32)], axis=1)
    o_ref[...] = out                                    # single lane-dense vst


# -----------------------------------------------------------------------------
# Wrapper: packs the weights at trace time and launches one fused pallas_call.
# -----------------------------------------------------------------------------
def cnn_apply(params, inputs):
    conv_params = list(params["shared"]) + list(params["local"])
    k, c_in0, hidden = conv_params[0][0].shape
    n_conv = len(conv_params)
    B, n_in = inputs.shape
    L_f = n_in - n_conv * (k - 1)
    n_out = params["lin_w"].shape[1]

    P = _round_up(n_in, 8)                   # per-batch sublane block
    M = B * P

    # Invariants that make the garbage-tail / wrapped rows harmless:
    # valid rows of every layer only ever read rows b*P + l with l < n_in <= P,
    # and the linear reads rows b*P .. b*P + L_f - 1 only.
    assert c_in0 == 1
    assert L_f >= 1 and n_in <= P and L_f <= P
    # Dropout p must be 0.0 for the identity treatment to be exact.
    assert float(params.get("dropout", 0.0)) == 0.0

    # Only wrapper prework: one pad + reshape producing the (M, 1) input column
    # x_flat[b*P + l] = inputs[b, l] (zero-padded tail rows).
    x = inputs.astype(jnp.float32)
    x_flat = jnp.pad(x, ((0, 0), (0, P - n_in))).reshape(M, 1)

    # Layer-0 packed weight: W0_all[0, j*H + d] = w0[j, d].
    w0 = conv_params[0][0].astype(jnp.float32).reshape(k, hidden)
    w0_all = w0.reshape(1, k * hidden)
    b0 = conv_params[0][1].reshape(1, hidden).astype(jnp.float32)

    # Hidden layers: lane-packed W_all[c, j*H + d] = w[j, c, d].
    rest_ops = []
    rest_specs = []
    for (w, b) in conv_params[1:]:
        w_all = jnp.transpose(w.astype(jnp.float32), (1, 0, 2)).reshape(
            hidden, k * hidden)
        rest_ops.append(w_all)
        rest_specs.append(pl.BlockSpec((hidden, k * hidden), lambda i: (0, 0)))
        rest_ops.append(b.reshape(1, hidden).astype(jnp.float32))
        rest_specs.append(pl.BlockSpec((1, hidden), lambda i: (0, 0)))

    # torch.flatten is channel-major: V2[c, l*n_out + n] = lin_w[c*L_f + l, n]
    # is a pure reshape of the (H*L_f, n_out) weight.
    v2 = params["lin_w"].astype(jnp.float32).reshape(hidden, L_f * n_out)
    lb = params["lin_b"].reshape(1, n_out).astype(jnp.float32)

    out_lanes = n_out if n_out >= 128 else 128      # lane-dense epilogue store
    out_pad = out_lanes - n_out

    kernel = functools.partial(
        _fused_kernel, n_conv=n_conv, k=k, hidden=hidden, P=P,
        B=B, L_f=L_f, n_out=n_out, out_pad=out_pad)

    out = pl.pallas_call(
        kernel,
        out_shape=jax.ShapeDtypeStruct((B, out_lanes), jnp.float32),
        grid=(1,),
        in_specs=[
            pl.BlockSpec((M, 1), lambda i: (0, 0)),
            pl.BlockSpec((1, k * hidden), lambda i: (0, 0)),
            pl.BlockSpec((1, hidden), lambda i: (0, 0)),
            *rest_specs,
            pl.BlockSpec((hidden, L_f * n_out), lambda i: (0, 0)),
            pl.BlockSpec((1, n_out), lambda i: (0, 0)),
        ],
        out_specs=pl.BlockSpec((B, out_lanes), lambda i: (0, 0)),
        compiler_params=pltpu.CompilerParams(
            dimension_semantics=("arbitrary",)),
    )(x_flat, w0_all, b0, *rest_ops, v2, lb)

    return out[:, :n_out]


# -----------------------------------------------------------------------------
# Parameter construction (deterministic, matches the module's __init__ shapes).
# Conv weights stored as (k, C_in, C_out); linear weight as (feat, n_outputs).
# -----------------------------------------------------------------------------
def init_params(key, conf, n_inputs, n_outputs):
    hidden = conf["model"]["hidden_size"]
    n_layers = conf["model"]["n_layers"]
    k = conf["model"]["k"]

    params = {"shared": [], "local": [],
              "dropout": conf["model"]["dropout"]}
    linear_input = n_inputs

    for i in range(n_layers):
        linear_input -= k - 1
        c_in = 1 if i == 0 else hidden
        key, kw, kb = jax.random.split(key, 3)
        w = 0.1 * jax.random.normal(kw, (k, c_in, hidden), jnp.float32)
        b = 0.1 * jax.random.normal(kb, (hidden,), jnp.float32)
        params["shared"].append((w, b))

    for _ in range(n_layers):
        linear_input -= k - 1
        key, kw, kb = jax.random.split(key, 3)
        w = 0.1 * jax.random.normal(kw, (k, hidden, hidden), jnp.float32)
        b = 0.1 * jax.random.normal(kb, (hidden,), jnp.float32)
        params["local"].append((w, b))

    feat = hidden * linear_input
    key, kw, kb = jax.random.split(key, 3)
    params["lin_w"] = 0.1 * jax.random.normal(kw, (feat, n_outputs), jnp.float32)
    params["lin_b"] = 0.1 * jax.random.normal(kb, (n_outputs,), jnp.float32)
    params["linear_input"] = linear_input
    return params


# -----------------------------------------------------------------------------
# Forward pass (mirrors CNN.forward return structure).
# -----------------------------------------------------------------------------
def cnn_forward(params, inputs, targets):
    loc_out = cnn_apply(params, inputs)

    # attack = argwhere(max(targets, dim=1).values == 0): data-dependent shape,
    # computed eagerly outside any kernel.
    attack_mask = jnp.max(targets, axis=1) == 0
    attack_inputs = inputs[attack_mask]          # == input[attack].squeeze(1)

    # pinn branch is computed but never returned in the reference -> skipped.
    return None, loc_out, attack_inputs


# -----------------------------------------------------------------------------
# Pure-JAX reference (plain XLA) for correctness checking.
# -----------------------------------------------------------------------------
def _reference_forward(params, inputs):
    x = inputs.astype(jnp.float32)[:, None, :]               # (B, 1, L) NCL
    for (w, b) in list(params["shared"]) + list(params["local"]):
        k = w.shape[0]
        c_out = w.shape[2]
        L_out = x.shape[2] - k + 1
        out = jnp.zeros((x.shape[0], c_out, L_out), jnp.float32)
        for j in range(k):
            out = out + jnp.einsum("bcl,cd->bdl", x[:, :, j:j + L_out], w[j])
        out = out + b[None, :, None]
        x = jnp.maximum(out, 0.0)
    flat = x.reshape(x.shape[0], -1)                          # channel-major
    return flat @ params["lin_w"] + params["lin_b"]


if __name__ == "__main__":
    conf = {"model": {"hidden_size": 32, "dropout": 0.0, "n_layers": 2, "k": 3}}
    n_inputs, n_outputs = 16, 4
    batch = 4

    key = jax.random.PRNGKey(0)
    key, kx, kt = jax.random.split(key, 3)
    params = init_params(key, conf, n_inputs, n_outputs)

    inputs = jax.random.normal(kx, (batch, n_inputs), jnp.float32)
    targets = jnp.abs(jax.random.normal(kt, (batch, 5), jnp.float32))
    # make rows 0 and 2 "attack" rows (max over targets == 0)
    targets = targets.at[0].set(0.0).at[2].set(0.0)

    none_out, loc_out, attack_inputs = cnn_forward(params, inputs, targets)
    jax.block_until_ready(loc_out)
    jax.block_until_ready(attack_inputs)

    ref_out = _reference_forward(params, inputs)
    jax.block_until_ready(ref_out)

    assert none_out is None
    assert loc_out.shape == (batch, n_outputs)
    assert attack_inputs.shape == (2, n_inputs)
    assert jnp.allclose(loc_out, ref_out, rtol=1e-3, atol=1e-3), (
        "max abs err = %f" % float(jnp.max(jnp.abs(loc_out - ref_out))))
    print("KERNEL_OK")
</pallas_src>

<mosaic_0001>
module attributes {stable_mosaic.version = 11 : i64} {
  func.func @_fused_kernel(%arg0: i32, %arg1: memref<64x1xf32, #tpu.memory_space<vmem>>, %arg2: memref<1x96xf32, #tpu.memory_space<vmem>>, %arg3: memref<1x32xf32, #tpu.memory_space<vmem>>, %arg4: memref<32x96xf32, #tpu.memory_space<vmem>>, %arg5: memref<1x32xf32, #tpu.memory_space<vmem>>, %arg6: memref<32x96xf32, #tpu.memory_space<vmem>>, %arg7: memref<1x32xf32, #tpu.memory_space<vmem>>, %arg8: memref<32x96xf32, #tpu.memory_space<vmem>>, %arg9: memref<1x32xf32, #tpu.memory_space<vmem>>, %arg10: memref<32x32xf32, #tpu.memory_space<vmem>>, %arg11: memref<1x4xf32, #tpu.memory_space<vmem>>, %arg12: memref<4x128xf32, #tpu.memory_space<vmem>>) attributes {dimension_semantics = [#tpu.dimension_semantics<arbitrary>], iteration_bounds = array<i64: 1>, scalar_prefetch = 0 : i64, scratch_operands = 0 : i64, tpu.core_type = #tpu.core_type<tc>, window_params = [{pipeline_mode = #tpu.pipeline_mode<synchronous>, transform_indices = @transform_0, window_bounds = array<i64: 64, 1>}, {pipeline_mode = #tpu.pipeline_mode<synchronous>, transform_indices = @transform_1, window_bounds = array<i64: 1, 96>}, {pipeline_mode = #tpu.pipeline_mode<synchronous>, transform_indices = @transform_2, window_bounds = array<i64: 1, 32>}, {pipeline_mode = #tpu.pipeline_mode<synchronous>, transform_indices = @transform_3, window_bounds = array<i64: 32, 96>}, {pipeline_mode = #tpu.pipeline_mode<synchronous>, transform_indices = @transform_4, window_bounds = array<i64: 1, 32>}, {pipeline_mode = #tpu.pipeline_mode<synchronous>, transform_indices = @transform_5, window_bounds = array<i64: 32, 96>}, {pipeline_mode = #tpu.pipeline_mode<synchronous>, transform_indices = @transform_6, window_bounds = array<i64: 1, 32>}, {pipeline_mode = #tpu.pipeline_mode<synchronous>, transform_indices = @transform_7, window_bounds = array<i64: 32, 96>}, {pipeline_mode = #tpu.pipeline_mode<synchronous>, transform_indices = @transform_8, window_bounds = array<i64: 1, 32>}, {pipeline_mode = #tpu.pipeline_mode<synchronous>, transform_indices = @transform_9, window_bounds = array<i64: 32, 32>}, {pipeline_mode = #tpu.pipeline_mode<synchronous>, transform_indices = @transform_10, window_bounds = array<i64: 1, 4>}, {pipeline_mode = #tpu.pipeline_mode<synchronous>, transform_indices = @transform_11, window_bounds = array<i64: 4, 128>}]} {
    %c0 = arith.constant 0 : index
    %c0_0 = arith.constant 0 : index
    %0 = vector.load %arg1[%c0, %c0_0] : memref<64x1xf32, #tpu.memory_space<vmem>>, vector<64x1xf32>
    %c0_1 = arith.constant 0 : index
    %c0_2 = arith.constant 0 : index
    %1 = vector.load %arg2[%c0_1, %c0_2] : memref<1x96xf32, #tpu.memory_space<vmem>>, vector<1x96xf32>
    %2 = vector.broadcast %0 : vector<64x1xf32> to vector<64x96xf32>
    %3 = vector.broadcast %1 : vector<1x96xf32> to vector<64x96xf32>
    %4 = arith.mulf %2, %3 : vector<64x96xf32>
    %5 = vector.extract_strided_slice %4 {offsets = [0, 0], sizes = [64, 32], strides = [1, 1]} : vector<64x96xf32> to vector<64x32xf32>
    %6 = vector.extract_strided_slice %4 {offsets = [0, 32], sizes = [64, 32], strides = [1, 1]} : vector<64x96xf32> to vector<64x32xf32>
    %c63_i32 = arith.constant 63 : i32
    %7 = tpu.dynamic_rotate %6 by %c63_i32 dim 0 : vector<64x32xf32>, i32 -> vector<64x32xf32>
    %8 = arith.addf %5, %7 : vector<64x32xf32>
    %9 = vector.extract_strided_slice %4 {offsets = [0, 64], sizes = [64, 32], strides = [1, 1]} : vector<64x96xf32> to vector<64x32xf32>
    %c62_i32 = arith.constant 62 : i32
    %10 = tpu.dynamic_rotate %9 by %c62_i32 dim 0 : vector<64x32xf32>, i32 -> vector<64x32xf32>
    %11 = arith.addf %8, %10 : vector<64x32xf32>
    %c0_3 = arith.constant 0 : index
    %c0_4 = arith.constant 0 : index
    %12 = vector.load %arg3[%c0_3, %c0_4] : memref<1x32xf32, #tpu.memory_space<vmem>>, vector<1x32xf32>
    %13 = vector.broadcast %12 : vector<1x32xf32> to vector<64x32xf32>
    %14 = arith.addf %11, %13 : vector<64x32xf32>
    %cst = arith.constant 0.000000e+00 : f32
    %15 = vector.broadcast %cst : f32 to vector<64x32xf32>
    %16 = arith.maximumf %14, %15 : vector<64x32xf32>
    %c0_5 = arith.constant 0 : index
    %c0_6 = arith.constant 0 : index
    %17 = vector.load %arg4[%c0_5, %c0_6] : memref<32x96xf32, #tpu.memory_space<vmem>>, vector<32x96xf32>
    %cst_7 = arith.constant dense<0.000000e+00> : vector<64x96xf32>
    %18 = tpu.matmul %16, %17, %cst_7 {dimension_numbers = #tpu.dot_dimension_numbers<[1], [0], [0], [1], [0, 0, 1, 1], [], []>} : vector<64x32xf32>, vector<32x96xf32>, vector<64x96xf32> -> vector<64x96xf32>
    %19 = vector.extract_strided_slice %18 {offsets = [0, 0], sizes = [64, 32], strides = [1, 1]} : vector<64x96xf32> to vector<64x32xf32>
    %20 = vector.extract_strided_slice %18 {offsets = [0, 32], sizes = [64, 32], strides = [1, 1]} : vector<64x96xf32> to vector<64x32xf32>
    %c63_i32_8 = arith.constant 63 : i32
    %21 = tpu.dynamic_rotate %20 by %c63_i32_8 dim 0 : vector<64x32xf32>, i32 -> vector<64x32xf32>
    %22 = arith.addf %19, %21 : vector<64x32xf32>
    %23 = vector.extract_strided_slice %18 {offsets = [0, 64], sizes = [64, 32], strides = [1, 1]} : vector<64x96xf32> to vector<64x32xf32>
    %c62_i32_9 = arith.constant 62 : i32
    %24 = tpu.dynamic_rotate %23 by %c62_i32_9 dim 0 : vector<64x32xf32>, i32 -> vector<64x32xf32>
    %25 = arith.addf %22, %24 : vector<64x32xf32>
    %c0_10 = arith.constant 0 : index
    %c0_11 = arith.constant 0 : index
    %26 = vector.load %arg5[%c0_10, %c0_11] : memref<1x32xf32, #tpu.memory_space<vmem>>, vector<1x32xf32>
    %27 = vector.broadcast %26 : vector<1x32xf32> to vector<64x32xf32>
    %28 = arith.addf %25, %27 : vector<64x32xf32>
    %cst_12 = arith.constant 0.000000e+00 : f32
    %29 = vector.broadcast %cst_12 : f32 to vector<64x32xf32>
    %30 = arith.maximumf %28, %29 : vector<64x32xf32>
    %c0_13 = arith.constant 0 : index
    %c0_14 = arith.constant 0 : index
    %31 = vector.load %arg6[%c0_13, %c0_14] : memref<32x96xf32, #tpu.memory_space<vmem>>, vector<32x96xf32>
    %cst_15 = arith.constant dense<0.000000e+00> : vector<64x96xf32>
    %32 = tpu.matmul %30, %31, %cst_15 {dimension_numbers = #tpu.dot_dimension_numbers<[1], [0], [0], [1], [0, 0, 1, 1], [], []>} : vector<64x32xf32>, vector<32x96xf32>, vector<64x96xf32> -> vector<64x96xf32>
    %33 = vector.extract_strided_slice %32 {offsets = [0, 0], sizes = [64, 32], strides = [1, 1]} : vector<64x96xf32> to vector<64x32xf32>
    %34 = vector.extract_strided_slice %32 {offsets = [0, 32], sizes = [64, 32], strides = [1, 1]} : vector<64x96xf32> to vector<64x32xf32>
    %c63_i32_16 = arith.constant 63 : i32
    %35 = tpu.dynamic_rotate %34 by %c63_i32_16 dim 0 : vector<64x32xf32>, i32 -> vector<64x32xf32>
    %36 = arith.addf %33, %35 : vector<64x32xf32>
    %37 = vector.extract_strided_slice %32 {offsets = [0, 64], sizes = [64, 32], strides = [1, 1]} : vector<64x96xf32> to vector<64x32xf32>
    %c62_i32_17 = arith.constant 62 : i32
    %38 = tpu.dynamic_rotate %37 by %c62_i32_17 dim 0 : vector<64x32xf32>, i32 -> vector<64x32xf32>
    %39 = arith.addf %36, %38 : vector<64x32xf32>
    %c0_18 = arith.constant 0 : index
    %c0_19 = arith.constant 0 : index
    %40 = vector.load %arg7[%c0_18, %c0_19] : memref<1x32xf32, #tpu.memory_space<vmem>>, vector<1x32xf32>
    %41 = vector.broadcast %40 : vector<1x32xf32> to vector<64x32xf32>
    %42 = arith.addf %39, %41 : vector<64x32xf32>
    %cst_20 = arith.constant 0.000000e+00 : f32
    %43 = vector.broadcast %cst_20 : f32 to vector<64x32xf32>
    %44 = arith.maximumf %42, %43 : vector<64x32xf32>
    %c0_21 = arith.constant 0 : index
    %c0_22 = arith.constant 0 : index
    %45 = vector.load %arg8[%c0_21, %c0_22] : memref<32x96xf32, #tpu.memory_space<vmem>>, vector<32x96xf32>
    %cst_23 = arith.constant dense<0.000000e+00> : vector<64x96xf32>
    %46 = tpu.matmul %44, %45, %cst_23 {dimension_numbers = #tpu.dot_dimension_numbers<[1], [0], [0], [1], [0, 0, 1, 1], [], []>} : vector<64x32xf32>, vector<32x96xf32>, vector<64x96xf32> -> vector<64x96xf32>
    %47 = vector.extract_strided_slice %46 {offsets = [0, 0], sizes = [64, 32], strides = [1, 1]} : vector<64x96xf32> to vector<64x32xf32>
    %48 = vector.extract_strided_slice %46 {offsets = [0, 32], sizes = [64, 32], strides = [1, 1]} : vector<64x96xf32> to vector<64x32xf32>
    %c63_i32_24 = arith.constant 63 : i32
    %49 = tpu.dynamic_rotate %48 by %c63_i32_24 dim 0 : vector<64x32xf32>, i32 -> vector<64x32xf32>
    %50 = arith.addf %47, %49 : vector<64x32xf32>
    %51 = vector.extract_strided_slice %46 {offsets = [0, 64], sizes = [64, 32], strides = [1, 1]} : vector<64x96xf32> to vector<64x32xf32>
    %c62_i32_25 = arith.constant 62 : i32
    %52 = tpu.dynamic_rotate %51 by %c62_i32_25 dim 0 : vector<64x32xf32>, i32 -> vector<64x32xf32>
    %53 = arith.addf %50, %52 : vector<64x32xf32>
    %c0_26 = arith.constant 0 : index
    %c0_27 = arith.constant 0 : index
    %54 = vector.load %arg9[%c0_26, %c0_27] : memref<1x32xf32, #tpu.memory_space<vmem>>, vector<1x32xf32>
    %55 = vector.broadcast %54 : vector<1x32xf32> to vector<64x32xf32>
    %56 = arith.addf %53, %55 : vector<64x32xf32>
    %cst_28 = arith.constant 0.000000e+00 : f32
    %57 = vector.broadcast %cst_28 : f32 to vector<64x32xf32>
    %58 = arith.maximumf %56, %57 : vector<64x32xf32>
    %c0_29 = arith.constant 0 : index
    %c0_30 = arith.constant 0 : index
    %59 = vector.load %arg10[%c0_29, %c0_30] : memref<32x32xf32, #tpu.memory_space<vmem>>, vector<32x32xf32>
    %cst_31 = arith.constant dense<0.000000e+00> : vector<64x32xf32>
    %60 = tpu.matmul %58, %59, %cst_31 {dimension_numbers = #tpu.dot_dimension_numbers<[1], [0], [0], [1], [0, 0, 1, 1], [], []>} : vector<64x32xf32>, vector<32x32xf32>, vector<64x32xf32> -> vector<64x32xf32>
    %61 = vector.extract_strided_slice %60 {offsets = [0, 0], sizes = [64, 4], strides = [1, 1]} : vector<64x32xf32> to vector<64x4xf32>
    %62 = vector.extract_strided_slice %60 {offsets = [0, 4], sizes = [64, 4], strides = [1, 1]} : vector<64x32xf32> to vector<64x4xf32>
    %c63_i32_32 = arith.constant 63 : i32
    %63 = tpu.dynamic_rotate %62 by %c63_i32_32 dim 0 : vector<64x4xf32>, i32 -> vector<64x4xf32>
    %64 = arith.addf %61, %63 : vector<64x4xf32>
    %65 = vector.extract_strided_slice %60 {offsets = [0, 8], sizes = [64, 4], strides = [1, 1]} : vector<64x32xf32> to vector<64x4xf32>
    %c62_i32_33 = arith.constant 62 : i32
    %66 = tpu.dynamic_rotate %65 by %c62_i32_33 dim 0 : vector<64x4xf32>, i32 -> vector<64x4xf32>
    %67 = arith.addf %64, %66 : vector<64x4xf32>
    %68 = vector.extract_strided_slice %60 {offsets = [0, 12], sizes = [64, 4], strides = [1, 1]} : vector<64x32xf32> to vector<64x4xf32>
    %c61_i32 = arith.constant 61 : i32
    %69 = tpu.dynamic_rotate %68 by %c61_i32 dim 0 : vector<64x4xf32>, i32 -> vector<64x4xf32>
    %70 = arith.addf %67, %69 : vector<64x4xf32>
    %71 = vector.extract_strided_slice %60 {offsets = [0, 16], sizes = [64, 4], strides = [1, 1]} : vector<64x32xf32> to vector<64x4xf32>
    %c60_i32 = arith.constant 60 : i32
    %72 = tpu.dynamic_rotate %71 by %c60_i32 dim 0 : vector<64x4xf32>, i32 -> vector<64x4xf32>
    %73 = arith.addf %70, %72 : vector<64x4xf32>
    %74 = vector.extract_strided_slice %60 {offsets = [0, 20], sizes = [64, 4], strides = [1, 1]} : vector<64x32xf32> to vector<64x4xf32>
    %c59_i32 = arith.constant 59 : i32
    %75 = tpu.dynamic_rotate %74 by %c59_i32 dim 0 : vector<64x4xf32>, i32 -> vector<64x4xf32>
    %76 = arith.addf %73, %75 : vector<64x4xf32>
    %77 = vector.extract_strided_slice %60 {offsets = [0, 24], sizes = [64, 4], strides = [1, 1]} : vector<64x32xf32> to vector<64x4xf32>
    %c58_i32 = arith.constant 58 : i32
    %78 = tpu.dynamic_rotate %77 by %c58_i32 dim 0 : vector<64x4xf32>, i32 -> vector<64x4xf32>
    %79 = arith.addf %76, %78 : vector<64x4xf32>
    %80 = vector.extract_strided_slice %60 {offsets = [0, 28], sizes = [64, 4], strides = [1, 1]} : vector<64x32xf32> to vector<64x4xf32>
    %c57_i32 = arith.constant 57 : i32
    %81 = tpu.dynamic_rotate %80 by %c57_i32 dim 0 : vector<64x4xf32>, i32 -> vector<64x4xf32>
    %82 = arith.addf %79, %81 : vector<64x4xf32>
    %83 = vector.extract_strided_slice %82 {offsets = [0, 0], sizes = [1, 4], strides = [1, 1]} : vector<64x4xf32> to vector<1x4xf32>
    %84 = vector.extract_strided_slice %82 {offsets = [16, 0], sizes = [1, 4], strides = [1, 1]} : vector<64x4xf32> to vector<1x4xf32>
    %85 = vector.extract_strided_slice %82 {offsets = [32, 0], sizes = [1, 4], strides = [1, 1]} : vector<64x4xf32> to vector<1x4xf32>
    %86 = vector.extract_strided_slice %82 {offsets = [48, 0], sizes = [1, 4], strides = [1, 1]} : vector<64x4xf32> to vector<1x4xf32>
    %87 = tpu.concatenate %83, %84, %85, %86 in 0 : vector<1x4xf32>, vector<1x4xf32>, vector<1x4xf32>, vector<1x4xf32> -> vector<4x4xf32>
    %c0_34 = arith.constant 0 : index
    %c0_35 = arith.constant 0 : index
    %88 = vector.load %arg11[%c0_34, %c0_35] : memref<1x4xf32, #tpu.memory_space<vmem>>, vector<1x4xf32>
    %89 = vector.broadcast %88 : vector<1x4xf32> to vector<4x4xf32>
    %90 = arith.addf %87, %89 : vector<4x4xf32>
    %cst_36 = arith.constant 0.000000e+00 : f32
    %91 = vector.broadcast %cst_36 : f32 to vector<4x124xf32>
    %92 = tpu.concatenate %90, %91 in 1 : vector<4x4xf32>, vector<4x124xf32> -> vector<4x128xf32>
    %c0_37 = arith.constant 0 : index
    %c0_38 = arith.constant 0 : index
    %93 = vector.load %arg12[%c0_37, %c0_38] : memref<4x128xf32, #tpu.memory_space<vmem>>, vector<4x128xf32>
    tpu.vector_store %arg12[%c0_37, %c0_38], %92 {strides = array<i32>} : memref<4x128xf32, #tpu.memory_space<vmem>>, vector<4x128xf32>,
    return
  }
  func.func @transform_0(%arg0: i32) -> (i32, i32) {
    %c0_i32 = arith.constant 0 : i32
    %c0_i32_0 = arith.constant 0 : i32
    %c0_i32_1 = arith.constant 0 : i32
    return %c0_i32, %c0_i32_0 : i32, i32
  }
  func.func @transform_1(%arg0: i32) -> (i32, i32) {
    %c0_i32 = arith.constant 0 : i32
    %c0_i32_0 = arith.constant 0 : i32
    %c0_i32_1 = arith.constant 0 : i32
    return %c0_i32, %c0_i32_0 : i32, i32
  }
  func.func @transform_2(%arg0: i32) -> (i32, i32) {
    %c0_i32 = arith.constant 0 : i32
    %c0_i32_0 = arith.constant 0 : i32
    %c0_i32_1 = arith.constant 0 : i32
    return %c0_i32, %c0_i32_0 : i32, i32
  }
  func.func @transform_3(%arg0: i32) -> (i32, i32) {
    %c0_i32 = arith.constant 0 : i32
    %c0_i32_0 = arith.constant 0 : i32
    %c0_i32_1 = arith.constant 0 : i32
    return %c0_i32, %c0_i32_0 : i32, i32
  }
  func.func @transform_4(%arg0: i32) -> (i32, i32) {
    %c0_i32 = arith.constant 0 : i32
    %c0_i32_0 = arith.constant 0 : i32
    %c0_i32_1 = arith.constant 0 : i32
    return %c0_i32, %c0_i32_0 : i32, i32
  }
  func.func @transform_5(%arg0: i32) -> (i32, i32) {
    %c0_i32 = arith.constant 0 : i32
    %c0_i32_0 = arith.constant 0 : i32
    %c0_i32_1 = arith.constant 0 : i32
    return %c0_i32, %c0_i32_0 : i32, i32
  }
  func.func @transform_6(%arg0: i32) -> (i32, i32) {
    %c0_i32 = arith.constant 0 : i32
    %c0_i32_0 = arith.constant 0 : i32
    %c0_i32_1 = arith.constant 0 : i32
    return %c0_i32, %c0_i32_0 : i32, i32
  }
  func.func @transform_7(%arg0: i32) -> (i32, i32) {
    %c0_i32 = arith.constant 0 : i32
    %c0_i32_0 = arith.constant 0 : i32
    %c0_i32_1 = arith.constant 0 : i32
    return %c0_i32, %c0_i32_0 : i32, i32
  }
  func.func @transform_8(%arg0: i32) -> (i32, i32) {
    %c0_i32 = arith.constant 0 : i32
    %c0_i32_0 = arith.constant 0 : i32
    %c0_i32_1 = arith.constant 0 : i32
    return %c0_i32, %c0_i32_0 : i32, i32
  }
  func.func @transform_9(%arg0: i32) -> (i32, i32) {
    %c0_i32 = arith.constant 0 : i32
    %c0_i32_0 = arith.constant 0 : i32
    %c0_i32_1 = arith.constant 0 : i32
    return %c0_i32, %c0_i32_0 : i32, i32
  }
  func.func @transform_10(%arg0: i32) -> (i32, i32) {
    %c0_i32 = arith.constant 0 : i32
    %c0_i32_0 = arith.constant 0 : i32
    %c0_i32_1 = arith.constant 0 : i32
    return %c0_i32, %c0_i32_0 : i32, i32
  }
  func.func @transform_11(%arg0: i32) -> (i32, i32) {
    %c0_i32 = arith.constant 0 : i32
    %c0_i32_0 = arith.constant 0 : i32
    %c0_i32_1 = arith.constant 0 : i32
    return %c0_i32, %c0_i32_0 : i32, i32
  }
}

</mosaic_0001>

<llo_original>
// kernel: tpu_custom_call.1
$region0: #{tpu_custom_call.1}
  #allocation0 [shape = 'u32[]', space=smem, size = 0x4, offset = 0x4, fixed_abs, tag = 'smem constant byte address 0x4 - core index']
  #allocation1 [shape = 'u32[72,128]{1,0:T(1,128)}', space=vmem, size = 0x9000, scoped, tag = 'internal scratch']
  %s0 = inlined_call_operand.vmem [shape: f32[64,1], index: 0, kind: input, shape index: {}]
  %s1 = inlined_call_operand.vmem [shape: f32[1,96], index: 1, kind: input, shape index: {}]
  %s2 = inlined_call_operand.vmem [shape: f32[1,32], index: 2, kind: input, shape index: {}]
  %s3 = inlined_call_operand.vmem [shape: f32[32,96], index: 3, kind: input, shape index: {}]
  %s4 = inlined_call_operand.vmem [shape: f32[1,32], index: 4, kind: input, shape index: {}]
  %s5 = inlined_call_operand.vmem [shape: f32[32,96], index: 5, kind: input, shape index: {}]
  %s6 = inlined_call_operand.vmem [shape: f32[1,32], index: 6, kind: input, shape index: {}]
  %s7 = inlined_call_operand.hbm [shape: f32[32,96], index: 7, kind: input, shape index: {}]
  %s8 = inlined_call_operand.vmem [shape: f32[1,32], index: 8, kind: input, shape index: {}]
  %s9 = inlined_call_operand.hbm [shape: f32[32,32], index: 9, kind: input, shape index: {}]
  %s10 = inlined_call_operand.vmem [shape: f32[1,4], index: 10, kind: input, shape index: {}]
  %s11 = inlined_call_operand.hbm [shape: f32[4,128], index: 11, kind: output, shape index: {}]
  %s12 = sld [smem:[#allocation0]]
  $region62: #{tpu_custom_call.1} parent=0
    _
  %s14 = ssub.s32 1, %s12
  %s15 = scalar_select 0, %s14, %s12
  $region1: #{tpu_custom_call.1} parent=0
    #allocation2 [shape = 'u8[16384]{0}', space=vmem, size = 0x4000, scoped, tag = 'input window, operand 7, single buffered']
    #allocation3 [shape = 's32[1]{0}', space=sflag, size = 0x4, scoped, tag = 'scoped memory for tpu_custom_call.1']
    #allocation4 [shape = 's32[1]{0}', space=sflag, size = 0x4, scoped, tag = 'scoped memory for tpu_custom_call.1']
    #allocation5 [shape = 'u8[16384]{0}', space=vmem, size = 0x4000, scoped, tag = 'input window, operand 9, single buffered']
    #allocation6 [shape = 's32[1]{0}', space=sflag, size = 0x4, scoped, tag = 'scoped memory for tpu_custom_call.1']
    #allocation7 [shape = 'u8[2048]{0}', space=vmem, size = 0x800, scoped, tag = 'output window, operand 0, single buffered']
    %16 = vsyncpa [#allocation3], 0
    %17 = vsyncpa [#allocation6], 0
    %18 = vsyncpa [#allocation4], 0
    // Predicated region
    $region2: #{tpu_custom_call.1} parent=1 // pred_check
      _
    $region3: #{tpu_custom_call.1} parent=1 // pred_check_branch
      %20 = sbr.rel (0) target = $region5
    $region4: #{tpu_custom_call.1} parent=1 // pred_region
      _
    $region5: #{tpu_custom_call.1} parent=1 // pred_fallthru
      _
    // Predicated region
    $region6: #{tpu_custom_call.1} parent=1 // pred_check
      _
    $region7: #{tpu_custom_call.1} parent=1 // pred_check_branch
      %22 = sbr.rel (0) target = $region9
    $region8: #{tpu_custom_call.1} parent=1 // pred_region
      _
    $region9: #{tpu_custom_call.1} parent=1 // pred_fallthru
      _
    // Predicated region
    $region10: #{tpu_custom_call.1} parent=1 // pred_check
      _
    $region11: #{tpu_custom_call.1} parent=1 // pred_check_branch
      %24 = sbr.rel (0) target = $region13
    $region12: #{tpu_custom_call.1} parent=1 // pred_region
      _
    $region13: #{tpu_custom_call.1} parent=1 // pred_fallthru
      _
    // Predicated region
    $region14: #{tpu_custom_call.1} parent=1 // pred_check
      _
    $region15: #{tpu_custom_call.1} parent=1 // pred_check_branch
      %26 = sbr.rel (0) target = $region17
    $region16: #{tpu_custom_call.1} parent=1 // pred_region
      _
    $region17: #{tpu_custom_call.1} parent=1 // pred_fallthru
      _
    // Predicated region
    $region18: #{tpu_custom_call.1} parent=1 // pred_check
      _
    $region19: #{tpu_custom_call.1} parent=1 // pred_check_branch
      %28 = sbr.rel (0) target = $region21
    $region20: #{tpu_custom_call.1} parent=1 // pred_region
      _
    $region21: #{tpu_custom_call.1} parent=1 // pred_fallthru
      _
    // Predicated region
    $region22: #{tpu_custom_call.1} parent=1 // pred_check
      _
    $region23: #{tpu_custom_call.1} parent=1 // pred_check_branch
      %30 = sbr.rel (0) target = $region25
    $region24: #{tpu_custom_call.1} parent=1 // pred_region
      _
    $region25: #{tpu_custom_call.1} parent=1 // pred_fallthru
      _
    // Predicated region
    $region26: #{tpu_custom_call.1} parent=1 // pred_check
      _
    $region27: #{tpu_custom_call.1} parent=1 // pred_check_branch
      %32 = sbr.rel (0) target = $region29
    $region28: #{tpu_custom_call.1} parent=1 // pred_region
      _
    $region29: #{tpu_custom_call.1} parent=1 // pred_fallthru
      _
    // Predicated region
    $region30: #{tpu_custom_call.1} parent=1 // pred_check
      _
    $region31: #{tpu_custom_call.1} parent=1 // pred_check_branch
      %34 = sbr.rel (0) target = $region33
    $region32: #{tpu_custom_call.1} parent=1 // pred_region
      %36 = vsyncadd [#allocation3], 0
      %s37 = sshll.u32 %s7, 4
      %s38 = int_to_ptr.hbm [resolvable:$true] %s37
      %s39 = sshll.u32 [#allocation2], 4
      %s40 = int_to_ptr.vmem [resolvable:$true] %s39
      %45 = dma.hbm_to_vmem [thread:$0]  %s38, 512, %s40, [#allocation3], 128, 128, 8
    $region33: #{tpu_custom_call.1} parent=1 // pred_fallthru
      _
    // Predicated region
    $region34: #{tpu_custom_call.1} parent=1 // pred_check
      _
    $region35: #{tpu_custom_call.1} parent=1 // pred_check_branch
      %47 = sbr.rel (0) target = $region37
    $region36: #{tpu_custom_call.1} parent=1 // pred_region
      _
    $region37: #{tpu_custom_call.1} parent=1 // pred_fallthru
      _
    // Predicated region
    $region38: #{tpu_custom_call.1} parent=1 // pred_check
      _
    $region39: #{tpu_custom_call.1} parent=1 // pred_check_branch
      %49 = sbr.rel (0) target = $region41
    $region40: #{tpu_custom_call.1} parent=1 // pred_region
      %51 = vsyncadd [#allocation6], 0
      %s52 = sshll.u32 %s9, 4
      %s53 = int_to_ptr.hbm [resolvable:$true] %s52
      %s54 = sshll.u32 [#allocation5], 4
      %s55 = int_to_ptr.vmem [resolvable:$true] %s54
      %60 = dma.hbm_to_vmem [thread:$0]  %s53, 512, %s55, [#allocation6], 128, 128, 8
    $region41: #{tpu_custom_call.1} parent=1 // pred_fallthru
      _
    // Predicated region
    $region42: #{tpu_custom_call.1} parent=1 // pred_check
      _
    $region43: #{tpu_custom_call.1} parent=1 // pred_check_branch
      %62 = sbr.rel (0) target = $region45
    $region44: #{tpu_custom_call.1} parent=1 // pred_region
      _
    $region45: #{tpu_custom_call.1} parent=1 // pred_fallthru
      _
    // Predicated region
    $region46: #{tpu_custom_call.1} parent=1 // pred_check
      _
    $region47: #{tpu_custom_call.1} parent=1 // pred_check_branch
      %64 = sbr.rel (0) target = $region49
    $region48: #{tpu_custom_call.1} parent=1 // pred_region
      %66 = dma.done [#allocation3], 512
    $region49: #{tpu_custom_call.1} parent=1 // pred_fallthru
      _
    // Predicated region
    $region50: #{tpu_custom_call.1} parent=1 // pred_check
      _
    $region51: #{tpu_custom_call.1} parent=1 // pred_check_branch
      %68 = sbr.rel (0) target = $region53
    $region52: #{tpu_custom_call.1} parent=1 // pred_region
      %70 = dma.done [#allocation6], 512
    $region53: #{tpu_custom_call.1} parent=1 // pred_fallthru
      _
    %v71 = vld [vmem:[%s0] sm:$0xff]
    %v72 = vld [vmem:[%s0 + $0x8] sm:$0xff]
    %v73 = vld [vmem:[%s0 + $0x10] sm:$0xff]
    %v74 = vld [vmem:[%s0 + $0x18] sm:$0xff]
    %v75 = vld [vmem:[%s0 + $0x20] sm:$0xff]
    %v76 = vld [vmem:[%s0 + $0x28] sm:$0xff]
    %v77 = vld [vmem:[%s0 + $0x30] sm:$0xff]
    %v78 = vld [vmem:[%s0 + $0x38] sm:$0xff]
    %v79 = vld [vmem:[%s1] sm:$0x1]
    %81 = vset.pattern.permute.xlu0 0
    %82 = vperm.xlu0 %81, %v71
    %v83 = vpop.permute.xlu0 %82
    %86 = vset.pattern.permute.xlu0 0
    %87 = vperm.xlu0 %86, %v72
    %v88 = vpop.permute.xlu0 %87
    %91 = vset.pattern.permute.xlu0 0
    %92 = vperm.xlu0 %91, %v73
    %v93 = vpop.permute.xlu0 %92
    %96 = vset.pattern.permute.xlu0 0
    %97 = vperm.xlu0 %96, %v74
    %v98 = vpop.permute.xlu0 %97
    %101 = vset.pattern.permute.xlu0 0
    %102 = vperm.xlu0 %101, %v75
    %v103 = vpop.permute.xlu0 %102
    %106 = vset.pattern.permute.xlu0 0
    %107 = vperm.xlu0 %106, %v76
    %v108 = vpop.permute.xlu0 %107
    %111 = vset.pattern.permute.xlu0 0
    %112 = vperm.xlu0 %111, %v77
    %v113 = vpop.permute.xlu0 %112
    %116 = vset.pattern.permute.xlu0 0
    %117 = vperm.xlu0 %116, %v78
    %v118 = vpop.permute.xlu0 %117
    %v121 = vperm.slane %v79, 0
    %v123 = vmul.f32 %v83, %v121
    %v124 = vmul.f32 %v88, %v121
    %v125 = vmul.f32 %v93, %v121
    %v126 = vmul.f32 %v98, %v121
    %v127 = vmul.f32 %v103, %v121
    %v128 = vmul.f32 %v108, %v121
    %v129 = vmul.f32 %v113, %v121
    %v130 = vmul.f32 %v118, %v121
    %139 = vrot.lane.b32.xlu0 %v123, 96
    %v140 = vpop.permute.xlu0 %139
    %141 = vrot.lane.b32.xlu0 %v124, 96
    %v142 = vpop.permute.xlu0 %141
    %143 = vrot.lane.b32.xlu0 %v125, 96
    %v144 = vpop.permute.xlu0 %143
    %145 = vrot.lane.b32.xlu0 %v126, 96
    %v146 = vpop.permute.xlu0 %145
    %147 = vrot.lane.b32.xlu0 %v127, 96
    %v148 = vpop.permute.xlu0 %147
    %149 = vrot.lane.b32.xlu0 %v128, 96
    %v150 = vpop.permute.xlu0 %149
    %151 = vrot.lane.b32.xlu0 %v129, 96
    %v152 = vpop.permute.xlu0 %151
    %153 = vrot.lane.b32.xlu0 %v130, 96
    %v154 = vpop.permute.xlu0 %153
    %v163 = vrot.slane %v140, 1
    %v164 = vrot.slane %v142, 1
    %v165 = vrot.slane %v144, 1
    %v166 = vrot.slane %v146, 1
    %v167 = vrot.slane %v148, 1
    %v168 = vrot.slane %v150, 1
    %v169 = vrot.slane %v152, 1
    %v170 = vrot.slane %v154, 1
    %v171 = vlaneseq
    %v172 = vshrl.u32 %v171, 7
    %vm173 = vcmp.lt.s32.totalorder %v172, 7
    %v174 = vsel %vm173, %v169, %v170
    %v175 = vsel %vm173, %v168, %v169
    %v176 = vsel %vm173, %v167, %v168
    %v177 = vsel %vm173, %v166, %v167
    %v178 = vsel %vm173, %v165, %v166
    %v179 = vsel %vm173, %v164, %v165
    %v180 = vsel %vm173, %v163, %v164
    %v181 = vsel %vm173, %v170, %v163
    %v182 = vadd.f32 %v123, %v180
    %v183 = vadd.f32 %v124, %v179
    %v184 = vadd.f32 %v125, %v178
    %v185 = vadd.f32 %v126, %v177
    %v186 = vadd.f32 %v127, %v176
    %v187 = vadd.f32 %v128, %v175
    %v188 = vadd.f32 %v129, %v174
    %v189 = vadd.f32 %v130, %v181
    %190 = vrot.lane.b32.xlu0 %v123, 64
    %v191 = vpop.permute.xlu0 %190
    %192 = vrot.lane.b32.xlu0 %v124, 64
    %v193 = vpop.permute.xlu0 %192
    %194 = vrot.lane.b32.xlu0 %v125, 64
    %v195 = vpop.permute.xlu0 %194
    %196 = vrot.lane.b32.xlu0 %v126, 64
    %v197 = vpop.permute.xlu0 %196
    %198 = vrot.lane.b32.xlu0 %v127, 64
    %v199 = vpop.permute.xlu0 %198
    %200 = vrot.lane.b32.xlu0 %v128, 64
    %v201 = vpop.permute.xlu0 %200
    %202 = vrot.lane.b32.xlu0 %v129, 64
    %v203 = vpop.permute.xlu0 %202
    %204 = vrot.lane.b32.xlu0 %v130, 64
    %v205 = vpop.permute.xlu0 %204
    %v214 = vrot.slane %v191, 2
    %v215 = vrot.slane %v193, 2
    %v216 = vrot.slane %v195, 2
    %v217 = vrot.slane %v197, 2
    %v218 = vrot.slane %v199, 2
    %v219 = vrot.slane %v201, 2
    %v220 = vrot.slane %v203, 2
    %v221 = vrot.slane %v205, 2
    %vm222 = vcmp.lt.s32.totalorder %v172, 6
    %v223 = vsel %vm222, %v220, %v221
    %v224 = vsel %vm222, %v219, %v220
    %v225 = vsel %vm222, %v218, %v219
    %v226 = vsel %vm222, %v217, %v218
    %v227 = vsel %vm222, %v216, %v217
    %v228 = vsel %vm222, %v215, %v216
    %v229 = vsel %vm222, %v214, %v215
    %v230 = vsel %vm222, %v221, %v214
    %v231 = vadd.f32 %v182, %v229
    %v232 = vadd.f32 %v183, %v228
    %v233 = vadd.f32 %v184, %v227
    %v234 = vadd.f32 %v185, %v226
    %v235 = vadd.f32 %v186, %v225
    %v236 = vadd.f32 %v187, %v224
    %v237 = vadd.f32 %v188, %v223
    %v238 = vadd.f32 %v189, %v230
    %v239 = vld [vmem:[%s2] sm:$0x1]
    %v241 = vperm.slane %v239, 0
    %v243 = vadd.f32 %v231, %v241
    %v244 = vadd.f32 %v232, %v241
    %v245 = vadd.f32 %v233, %v241
    %v246 = vadd.f32 %v234, %v241
    %v247 = vadd.f32 %v235, %v241
    %v248 = vadd.f32 %v236, %v241
    %v249 = vadd.f32 %v237, %v241
    %v250 = vadd.f32 %v238, %v241
    %v251 = vmax.f32 %v243, 0.0
    %v252 = vmax.f32 %v244, 0.0
    %v253 = vmax.f32 %v245, 0.0
    %v254 = vmax.f32 %v246, 0.0
    %v255 = vmax.f32 %v247, 0.0
    %v256 = vmax.f32 %v248, 0.0
    %v257 = vmax.f32 %v249, 0.0
    %v258 = vmax.f32 %v250, 0.0
    %v259 = vld [vmem:[%s3] sm:$0xff]
    %v260 = vld [vmem:[%s3 + $0x8] sm:$0xff]
    %v261 = vld [vmem:[%s3 + $0x10] sm:$0xff]
    %v262 = vld [vmem:[%s3 + $0x18] sm:$0xff]
    %vm263 = vcmask 261120
    %v265 = vsel %vm263, %v251, 0
    %v268 = vsel %vm263, %v252, 0
    %v271 = vsel %vm263, %v253, 0
    %v274 = vsel %vm263, %v254, 0
    %v277 = vsel %vm263, %v255, 0
    %v280 = vsel %vm263, %v256, 0
    %v283 = vsel %vm263, %v257, 0
    %v286 = vsel %vm263, %v258, 0
    %288 = vmatpush.msra.mxu0 0.0
    %289 = vmatpush.msra.mxu0 0.0
    %290 = vmatpush.msra.mxu0 0.0
    %291 = vmatpush.msra.mxu0 0.0
    %292 = vmatpush.msra.mxu0 0.0
    %293 = vmatpush.msra.mxu0 0.0
    %294 = vmatpush.msra.mxu0 0.0
    %295 = vmatpush.msra.mxu0 0.0
    %296 = vmatpush.msra.mxu0 0.0
    %297 = vmatpush.msra.mxu0 0.0
    %298 = vmatpush.msra.mxu0 0.0
    %299 = vmatpush.msra.mxu0 0.0
    %300 = vmatpush.msra.mxu0 %v262
    %301 = vmatpush.msra.mxu0 %v261
    %302 = vmatpush.msra.mxu0 %v260
    %303 = vmatpush.msra.mxu0 %v259
    %304 = vmatmul.f32.gmra.mxu0 %v265
    %v305 = vpop.f32.mrf.mxu0
    %v306 = vadd.f32 0.0, %v305
    %307 = vmatmul.f32.gmra.mxu0 %v268
    %v308 = vpop.f32.mrf.mxu0
    %v309 = vadd.f32 0.0, %v308
    %310 = vmatmul.f32.gmra.mxu0 %v271
    %v311 = vpop.f32.mrf.mxu0
    %v312 = vadd.f32 0.0, %v311
    %313 = vmatmul.f32.gmra.mxu0 %v274
    %v314 = vpop.f32.mrf.mxu0
    %v315 = vadd.f32 0.0, %v314
    %316 = vmatmul.f32.gmra.mxu0 %v277
    %v317 = vpop.f32.mrf.mxu0
    %v318 = vadd.f32 0.0, %v317
    %319 = vmatmul.f32.gmra.mxu0 %v280
    %v320 = vpop.f32.mrf.mxu0
    %v321 = vadd.f32 0.0, %v320
    %322 = vmatmul.f32.gmra.mxu0 %v283
    %v323 = vpop.f32.mrf.mxu0
    %v324 = vadd.f32 0.0, %v323
    %325 = vmatmul.f32.gmra.mxu0 %v286
    %v326 = vpop.f32.mrf.mxu0
    %v327 = vadd.f32 0.0, %v326
    %328 = vdwg.mxu0
    %337 = vrot.lane.b32.xlu0 %v306, 96
    %v338 = vpop.permute.xlu0 %337
    %339 = vrot.lane.b32.xlu0 %v309, 96
    %v340 = vpop.permute.xlu0 %339
    %341 = vrot.lane.b32.xlu0 %v312, 96
    %v342 = vpop.permute.xlu0 %341
    %343 = vrot.lane.b32.xlu0 %v315, 96
    %v344 = vpop.permute.xlu0 %343
    %345 = vrot.lane.b32.xlu0 %v318, 96
    %v346 = vpop.permute.xlu0 %345
    %347 = vrot.lane.b32.xlu0 %v321, 96
    %v348 = vpop.permute.xlu0 %347
    %349 = vrot.lane.b32.xlu0 %v324, 96
    %v350 = vpop.permute.xlu0 %349
    %351 = vrot.lane.b32.xlu0 %v327, 96
    %v352 = vpop.permute.xlu0 %351
    %v361 = vrot.slane %v338, 1
    %v362 = vrot.slane %v340, 1
    %v363 = vrot.slane %v342, 1
    %v364 = vrot.slane %v344, 1
    %v365 = vrot.slane %v346, 1
    %v366 = vrot.slane %v348, 1
    %v367 = vrot.slane %v350, 1
    %v368 = vrot.slane %v352, 1
    %v369 = vsel %vm173, %v367, %v368
    %v370 = vsel %vm173, %v366, %v367
    %v371 = vsel %vm173, %v365, %v366
    %v372 = vsel %vm173, %v364, %v365
    %v373 = vsel %vm173, %v363, %v364
    %v374 = vsel %vm173, %v362, %v363
    %v375 = vsel %vm173, %v361, %v362
    %v376 = vsel %vm173, %v368, %v361
    %v377 = vadd.f32 %v306, %v375
    %v378 = vadd.f32 %v309, %v374
    %v379 = vadd.f32 %v312, %v373
    %v380 = vadd.f32 %v315, %v372
    %v381 = vadd.f32 %v318, %v371
    %v382 = vadd.f32 %v321, %v370
    %v383 = vadd.f32 %v324, %v369
    %v384 = vadd.f32 %v327, %v376
    %385 = vrot.lane.b32.xlu0 %v306, 64
    %v386 = vpop.permute.xlu0 %385
    %387 = vrot.lane.b32.xlu0 %v309, 64
    %v388 = vpop.permute.xlu0 %387
    %389 = vrot.lane.b32.xlu0 %v312, 64
    %v390 = vpop.permute.xlu0 %389
    %391 = vrot.lane.b32.xlu0 %v315, 64
    %v392 = vpop.permute.xlu0 %391
    %393 = vrot.lane.b32.xlu0 %v318, 64
    %v394 = vpop.permute.xlu0 %393
    %395 = vrot.lane.b32.xlu0 %v321, 64
    %v396 = vpop.permute.xlu0 %395
    %397 = vrot.lane.b32.xlu0 %v324, 64
    %v398 = vpop.permute.xlu0 %397
    %399 = vrot.lane.b32.xlu0 %v327, 64
    %v400 = vpop.permute.xlu0 %399
    %v409 = vrot.slane %v386, 2
    %v410 = vrot.slane %v388, 2
    %v411 = vrot.slane %v390, 2
    %v412 = vrot.slane %v392, 2
    %v413 = vrot.slane %v394, 2
    %v414 = vrot.slane %v396, 2
    %v415 = vrot.slane %v398, 2
    %v416 = vrot.slane %v400, 2
    %v417 = vsel %vm222, %v415, %v416
    %v418 = vsel %vm222, %v414, %v415
    %v419 = vsel %vm222, %v413, %v414
    %v420 = vsel %vm222, %v412, %v413
    %v421 = vsel %vm222, %v411, %v412
    %v422 = vsel %vm222, %v410, %v411
    %v423 = vsel %vm222, %v409, %v410
    %v424 = vsel %vm222, %v416, %v409
    %v425 = vadd.f32 %v377, %v423
    %v426 = vadd.f32 %v378, %v422
    %v427 = vadd.f32 %v379, %v421
    %v428 = vadd.f32 %v380, %v420
    %v429 = vadd.f32 %v381, %v419
    %v430 = vadd.f32 %v382, %v418
    %v431 = vadd.f32 %v383, %v417
    %v432 = vadd.f32 %v384, %v424
    %v433 = vld [vmem:[%s4] sm:$0x1]
    %v435 = vperm.slane %v433, 0
    %v437 = vadd.f32 %v425, %v435
    %v438 = vadd.f32 %v426, %v435
    %v439 = vadd.f32 %v427, %v435
    %v440 = vadd.f32 %v428, %v435
    %v441 = vadd.f32 %v429, %v435
    %v442 = vadd.f32 %v430, %v435
    %v443 = vadd.f32 %v431, %v435
    %v444 = vadd.f32 %v432, %v435
    %v445 = vmax.f32 %v437, 0.0
    %v446 = vmax.f32 %v438, 0.0
    %v447 = vmax.f32 %v439, 0.0
    %v448 = vmax.f32 %v440, 0.0
    %v449 = vmax.f32 %v441, 0.0
    %v450 = vmax.f32 %v442, 0.0
    %v451 = vmax.f32 %v443, 0.0
    %v452 = vmax.f32 %v444, 0.0
    %v453 = vld [vmem:[%s5] sm:$0xff]
    %v454 = vld [vmem:[%s5 + $0x8] sm:$0xff]
    %v455 = vld [vmem:[%s5 + $0x10] sm:$0xff]
    %v456 = vld [vmem:[%s5 + $0x18] sm:$0xff]
    %v458 = vsel %vm263, %v445, 0
    %v461 = vsel %vm263, %v446, 0
    %v464 = vsel %vm263, %v447, 0
    %v467 = vsel %vm263, %v448, 0
    %v470 = vsel %vm263, %v449, 0
    %v473 = vsel %vm263, %v450, 0
    %v476 = vsel %vm263, %v451, 0
    %v479 = vsel %vm263, %v452, 0
    %481 = vmatpush.msra.mxu0 0.0
    %482 = vmatpush.msra.mxu0 0.0
    %483 = vmatpush.msra.mxu0 0.0
    %484 = vmatpush.msra.mxu0 0.0
    %485 = vmatpush.msra.mxu0 0.0
    %486 = vmatpush.msra.mxu0 0.0
    %487 = vmatpush.msra.mxu0 0.0
    %488 = vmatpush.msra.mxu0 0.0
    %489 = vmatpush.msra.mxu0 0.0
    %490 = vmatpush.msra.mxu0 0.0
    %491 = vmatpush.msra.mxu0 0.0
    %492 = vmatpush.msra.mxu0 0.0
    %493 = vmatpush.msra.mxu0 %v456
    %494 = vmatpush.msra.mxu0 %v455
    %495 = vmatpush.msra.mxu0 %v454
    %496 = vmatpush.msra.mxu0 %v453
    %497 = vmatmul.f32.gmra.mxu0 %v458
    %v498 = vpop.f32.mrf.mxu0
    %v499 = vadd.f32 0.0, %v498
    %500 = vmatmul.f32.gmra.mxu0 %v461
    %v501 = vpop.f32.mrf.mxu0
    %v502 = vadd.f32 0.0, %v501
    %503 = vmatmul.f32.gmra.mxu0 %v464
    %v504 = vpop.f32.mrf.mxu0
    %v505 = vadd.f32 0.0, %v504
    %506 = vmatmul.f32.gmra.mxu0 %v467
    %v507 = vpop.f32.mrf.mxu0
    %v508 = vadd.f32 0.0, %v507
    %509 = vmatmul.f32.gmra.mxu0 %v470
    %v510 = vpop.f32.mrf.mxu0
    %v511 = vadd.f32 0.0, %v510
    %512 = vmatmul.f32.gmra.mxu0 %v473
    %v513 = vpop.f32.mrf.mxu0
    %v514 = vadd.f32 0.0, %v513
    %515 = vmatmul.f32.gmra.mxu0 %v476
    %v516 = vpop.f32.mrf.mxu0
    %v517 = vadd.f32 0.0, %v516
    %518 = vmatmul.f32.gmra.mxu0 %v479
    %v519 = vpop.f32.mrf.mxu0
    %v520 = vadd.f32 0.0, %v519
    %521 = vdwg.mxu0
    %530 = vrot.lane.b32.xlu0 %v499, 96
    %v531 = vpop.permute.xlu0 %530
    %532 = vrot.lane.b32.xlu0 %v502, 96
    %v533 = vpop.permute.xlu0 %532
    %534 = vrot.lane.b32.xlu0 %v505, 96
    %v535 = vpop.permute.xlu0 %534
    %536 = vrot.lane.b32.xlu0 %v508, 96
    %v537 = vpop.permute.xlu0 %536
    %538 = vrot.lane.b32.xlu0 %v511, 96
    %v539 = vpop.permute.xlu0 %538
    %540 = vrot.lane.b32.xlu0 %v514, 96
    %v541 = vpop.permute.xlu0 %540
    %542 = vrot.lane.b32.xlu0 %v517, 96
    %v543 = vpop.permute.xlu0 %542
    %544 = vrot.lane.b32.xlu0 %v520, 96
    %v545 = vpop.permute.xlu0 %544
    %v554 = vrot.slane %v531, 1
    %v555 = vrot.slane %v533, 1
    %v556 = vrot.slane %v535, 1
    %v557 = vrot.slane %v537, 1
    %v558 = vrot.slane %v539, 1
    %v559 = vrot.slane %v541, 1
    %v560 = vrot.slane %v543, 1
    %v561 = vrot.slane %v545, 1
    %v562 = vsel %vm173, %v560, %v561
    %v563 = vsel %vm173, %v559, %v560
    %v564 = vsel %vm173, %v558, %v559
    %v565 = vsel %vm173, %v557, %v558
    %v566 = vsel %vm173, %v556, %v557
    %v567 = vsel %vm173, %v555, %v556
    %v568 = vsel %vm173, %v554, %v555
    %v569 = vsel %vm173, %v561, %v554
    %v570 = vadd.f32 %v499, %v568
    %v571 = vadd.f32 %v502, %v567
    %v572 = vadd.f32 %v505, %v566
    %v573 = vadd.f32 %v508, %v565
    %v574 = vadd.f32 %v511, %v564
    %v575 = vadd.f32 %v514, %v563
    %v576 = vadd.f32 %v517, %v562
    %v577 = vadd.f32 %v520, %v569
    %578 = vrot.lane.b32.xlu0 %v499, 64
    %v579 = vpop.permute.xlu0 %578
    %580 = vrot.lane.b32.xlu0 %v502, 64
    %v581 = vpop.permute.xlu0 %580
    %582 = vrot.lane.b32.xlu0 %v505, 64
    %v583 = vpop.permute.xlu0 %582
    %584 = vrot.lane.b32.xlu0 %v508, 64
    %v585 = vpop.permute.xlu0 %584
    %586 = vrot.lane.b32.xlu0 %v511, 64
    %v587 = vpop.permute.xlu0 %586
    %588 = vrot.lane.b32.xlu0 %v514, 64
    %v589 = vpop.permute.xlu0 %588
    %590 = vrot.lane.b32.xlu0 %v517, 64
    %v591 = vpop.permute.xlu0 %590
    %592 = vrot.lane.b32.xlu0 %v520, 64
    %v593 = vpop.permute.xlu0 %592
    %v602 = vrot.slane %v579, 2
    %v603 = vrot.slane %v581, 2
    %v604 = vrot.slane %v583, 2
    %v605 = vrot.slane %v585, 2
    %v606 = vrot.slane %v587, 2
    %v607 = vrot.slane %v589, 2
    %v608 = vrot.slane %v591, 2
    %v609 = vrot.slane %v593, 2
    %v610 = vsel %vm222, %v608, %v609
    %v611 = vsel %vm222, %v607, %v608
    %v612 = vsel %vm222, %v606, %v607
    %v613 = vsel %vm222, %v605, %v606
    %v614 = vsel %vm222, %v604, %v605
    %v615 = vsel %vm222, %v603, %v604
    %v616 = vsel %vm222, %v602, %v603
    %v617 = vsel %vm222, %v609, %v602
    %v618 = vadd.f32 %v570, %v616
    %v619 = vadd.f32 %v571, %v615
    %v620 = vadd.f32 %v572, %v614
    %v621 = vadd.f32 %v573, %v613
    %v622 = vadd.f32 %v574, %v612
    %v623 = vadd.f32 %v575, %v611
    %v624 = vadd.f32 %v576, %v610
    %v625 = vadd.f32 %v577, %v617
    %v626 = vld [vmem:[%s6] sm:$0x1]
    %v628 = vperm.slane %v626, 0
    %v630 = vadd.f32 %v618, %v628
    %v631 = vadd.f32 %v619, %v628
    %v632 = vadd.f32 %v620, %v628
    %v633 = vadd.f32 %v621, %v628
    %v634 = vadd.f32 %v622, %v628
    %v635 = vadd.f32 %v623, %v628
    %v636 = vadd.f32 %v624, %v628
    %v637 = vadd.f32 %v625, %v628
    %v638 = vmax.f32 %v630, 0.0
    %v639 = vmax.f32 %v631, 0.0
    %v640 = vmax.f32 %v632, 0.0
    %v641 = vmax.f32 %v633, 0.0
    %v642 = vmax.f32 %v634, 0.0
    %v643 = vmax.f32 %v635, 0.0
    %v644 = vmax.f32 %v636, 0.0
    %v645 = vmax.f32 %v637, 0.0
    %v646 = vld [vmem:[#allocation2] sm:$0xff]
    %v647 = vld [vmem:[#allocation2 + $0x8] sm:$0xff]
    %v648 = vld [vmem:[#allocation2 + $0x10] sm:$0xff]
    %v649 = vld [vmem:[#allocation2 + $0x18] sm:$0xff]
    %v651 = vsel %vm263, %v638, 0
    %v654 = vsel %vm263, %v639, 0
    %v657 = vsel %vm263, %v640, 0
    %v660 = vsel %vm263, %v641, 0
    %v663 = vsel %vm263, %v642, 0
    %v666 = vsel %vm263, %v643, 0
    %v669 = vsel %vm263, %v644, 0
    %v672 = vsel %vm263, %v645, 0
    %674 = vmatpush.msra.mxu0 0.0
    %675 = vmatpush.msra.mxu0 0.0
    %676 = vmatpush.msra.mxu0 0.0
    %677 = vmatpush.msra.mxu0 0.0
    %678 = vmatpush.msra.mxu0 0.0
    %679 = vmatpush.msra.mxu0 0.0
    %680 = vmatpush.msra.mxu0 0.0
    %681 = vmatpush.msra.mxu0 0.0
    %682 = vmatpush.msra.mxu0 0.0
    %683 = vmatpush.msra.mxu0 0.0
    %684 = vmatpush.msra.mxu0 0.0
    %685 = vmatpush.msra.mxu0 0.0
    %686 = vmatpush.msra.mxu0 %v649
    %687 = vmatpush.msra.mxu0 %v648
    %688 = vmatpush.msra.mxu0 %v647
    %689 = vmatpush.msra.mxu0 %v646
    %690 = vmatmul.f32.gmra.mxu0 %v651
    %v691 = vpop.f32.mrf.mxu0
    %v692 = vadd.f32 0.0, %v691
    %693 = vmatmul.f32.gmra.mxu0 %v654
    %v694 = vpop.f32.mrf.mxu0
    %v695 = vadd.f32 0.0, %v694
    %696 = vmatmul.f32.gmra.mxu0 %v657
    %v697 = vpop.f32.mrf.mxu0
    %v698 = vadd.f32 0.0, %v697
    %699 = vmatmul.f32.gmra.mxu0 %v660
    %v700 = vpop.f32.mrf.mxu0
    %v701 = vadd.f32 0.0, %v700
    %702 = vmatmul.f32.gmra.mxu0 %v663
    %v703 = vpop.f32.mrf.mxu0
    %v704 = vadd.f32 0.0, %v703
    %705 = vmatmul.f32.gmra.mxu0 %v666
    %v706 = vpop.f32.mrf.mxu0
    %v707 = vadd.f32 0.0, %v706
    %708 = vmatmul.f32.gmra.mxu0 %v669
    %v709 = vpop.f32.mrf.mxu0
    %v710 = vadd.f32 0.0, %v709
    %711 = vmatmul.f32.gmra.mxu0 %v672
    %v712 = vpop.f32.mrf.mxu0
    %v713 = vadd.f32 0.0, %v712
    %714 = vdwg.mxu0
    %723 = vrot.lane.b32.xlu0 %v692, 96
    %v724 = vpop.permute.xlu0 %723
    %725 = vrot.lane.b32.xlu0 %v695, 96
    %v726 = vpop.permute.xlu0 %725
    %727 = vrot.lane.b32.xlu0 %v698, 96
    %v728 = vpop.permute.xlu0 %727
    %729 = vrot.lane.b32.xlu0 %v701, 96
    %v730 = vpop.permute.xlu0 %729
    %731 = vrot.lane.b32.xlu0 %v704, 96
    %v732 = vpop.permute.xlu0 %731
    %733 = vrot.lane.b32.xlu0 %v707, 96
    %v734 = vpop.permute.xlu0 %733
    %735 = vrot.lane.b32.xlu0 %v710, 96
    %v736 = vpop.permute.xlu0 %735
    %737 = vrot.lane.b32.xlu0 %v713, 96
    %v738 = vpop.permute.xlu0 %737
    %v747 = vrot.slane %v724, 1
    %v748 = vrot.slane %v726, 1
    %v749 = vrot.slane %v728, 1
    %v750 = vrot.slane %v730, 1
    %v751 = vrot.slane %v732, 1
    %v752 = vrot.slane %v734, 1
    %v753 = vrot.slane %v736, 1
    %v754 = vrot.slane %v738, 1
    %v755 = vsel %vm173, %v753, %v754
    %v756 = vsel %vm173, %v752, %v753
    %v757 = vsel %vm173, %v751, %v752
    %v758 = vsel %vm173, %v750, %v751
    %v759 = vsel %vm173, %v749, %v750
    %v760 = vsel %vm173, %v748, %v749
    %v761 = vsel %vm173, %v747, %v748
    %v762 = vsel %vm173, %v754, %v747
    %v763 = vadd.f32 %v692, %v761
    %v764 = vadd.f32 %v695, %v760
    %v765 = vadd.f32 %v698, %v759
    %v766 = vadd.f32 %v701, %v758
    %v767 = vadd.f32 %v704, %v757
    %v768 = vadd.f32 %v707, %v756
    %v769 = vadd.f32 %v710, %v755
    %v770 = vadd.f32 %v713, %v762
    %771 = vrot.lane.b32.xlu0 %v692, 64
    %v772 = vpop.permute.xlu0 %771
    %773 = vrot.lane.b32.xlu0 %v695, 64
    %v774 = vpop.permute.xlu0 %773
    %775 = vrot.lane.b32.xlu0 %v698, 64
    %v776 = vpop.permute.xlu0 %775
    %777 = vrot.lane.b32.xlu0 %v701, 64
    %v778 = vpop.permute.xlu0 %777
    %779 = vrot.lane.b32.xlu0 %v704, 64
    %v780 = vpop.permute.xlu0 %779
    %781 = vrot.lane.b32.xlu0 %v707, 64
    %v782 = vpop.permute.xlu0 %781
    %783 = vrot.lane.b32.xlu0 %v710, 64
    %v784 = vpop.permute.xlu0 %783
    %785 = vrot.lane.b32.xlu0 %v713, 64
    %v786 = vpop.permute.xlu0 %785
    %v795 = vrot.slane %v772, 2
    %v796 = vrot.slane %v774, 2
    %v797 = vrot.slane %v776, 2
    %v798 = vrot.slane %v778, 2
    %v799 = vrot.slane %v780, 2
    %v800 = vrot.slane %v782, 2
    %v801 = vrot.slane %v784, 2
    %v802 = vrot.slane %v786, 2
    %v803 = vsel %vm222, %v801, %v802
    %v804 = vsel %vm222, %v800, %v801
    %v805 = vsel %vm222, %v799, %v800
    %v806 = vsel %vm222, %v798, %v799
    %v807 = vsel %vm222, %v797, %v798
    %v808 = vsel %vm222, %v796, %v797
    %v809 = vsel %vm222, %v795, %v796
    %v810 = vsel %vm222, %v802, %v795
    %v811 = vadd.f32 %v763, %v809
    %v812 = vadd.f32 %v764, %v808
    %v813 = vadd.f32 %v765, %v807
    %v814 = vadd.f32 %v766, %v806
    %v815 = vadd.f32 %v767, %v805
    %v816 = vadd.f32 %v768, %v804
    %v817 = vadd.f32 %v769, %v803
    %v818 = vadd.f32 %v770, %v810
    %v819 = vld [vmem:[%s8] sm:$0x1]
    %v821 = vperm.slane %v819, 0
    %v823 = vadd.f32 %v811, %v821
    %v824 = vadd.f32 %v812, %v821
    %v825 = vadd.f32 %v813, %v821
    %v826 = vadd.f32 %v814, %v821
    %v827 = vadd.f32 %v815, %v821
    %v828 = vadd.f32 %v816, %v821
    %v829 = vadd.f32 %v817, %v821
    %v830 = vadd.f32 %v818, %v821
    %v831 = vmax.f32 %v823, 0.0
    %v832 = vmax.f32 %v824, 0.0
    %v833 = vmax.f32 %v825, 0.0
    %v834 = vmax.f32 %v826, 0.0
    %v835 = vmax.f32 %v827, 0.0
    %v836 = vmax.f32 %v828, 0.0
    %v837 = vmax.f32 %v829, 0.0
    %v838 = vmax.f32 %v830, 0.0
    %v839 = vld [vmem:[#allocation5] sm:$0xff]
    %v840 = vld [vmem:[#allocation5 + $0x8] sm:$0xff]
    %v841 = vld [vmem:[#allocation5 + $0x10] sm:$0xff]
    %v842 = vld [vmem:[#allocation5 + $0x18] sm:$0xff]
    %v844 = vsel %vm263, %v831, 0
    %v847 = vsel %vm263, %v832, 0
    %v850 = vsel %vm263, %v833, 0
    %v853 = vsel %vm263, %v834, 0
    %v856 = vsel %vm263, %v835, 0
    %v859 = vsel %vm263, %v836, 0
    %v862 = vsel %vm263, %v837, 0
    %v865 = vsel %vm263, %v838, 0
    %867 = vmatpush.msra.mxu0 0.0
    %868 = vmatpush.msra.mxu0 0.0
    %869 = vmatpush.msra.mxu0 0.0
    %870 = vmatpush.msra.mxu0 0.0
    %871 = vmatpush.msra.mxu0 0.0
    %872 = vmatpush.msra.mxu0 0.0
    %873 = vmatpush.msra.mxu0 0.0
    %874 = vmatpush.msra.mxu0 0.0
    %875 = vmatpush.msra.mxu0 0.0
    %876 = vmatpush.msra.mxu0 0.0
    %877 = vmatpush.msra.mxu0 0.0
    %878 = vmatpush.msra.mxu0 0.0
    %879 = vmatpush.msra.mxu0 %v842
    %880 = vmatpush.msra.mxu0 %v841
    %881 = vmatpush.msra.mxu0 %v840
    %882 = vmatpush.msra.mxu0 %v839
    %883 = vmatmul.f32.gmra.mxu0 %v844
    %v884 = vpop.f32.mrf.mxu0
    %v885 = vadd.f32 0.0, %v884
    %886 = vmatmul.f32.gmra.mxu0 %v847
    %v887 = vpop.f32.mrf.mxu0
    %v888 = vadd.f32 0.0, %v887
    %889 = vmatmul.f32.gmra.mxu0 %v850
    %v890 = vpop.f32.mrf.mxu0
    %v891 = vadd.f32 0.0, %v890
    %892 = vmatmul.f32.gmra.mxu0 %v853
    %v893 = vpop.f32.mrf.mxu0
    %v894 = vadd.f32 0.0, %v893
    %895 = vmatmul.f32.gmra.mxu0 %v856
    %v896 = vpop.f32.mrf.mxu0
    %v897 = vadd.f32 0.0, %v896
    %898 = vmatmul.f32.gmra.mxu0 %v859
    %v899 = vpop.f32.mrf.mxu0
    %v900 = vadd.f32 0.0, %v899
    %901 = vmatmul.f32.gmra.mxu0 %v862
    %v902 = vpop.f32.mrf.mxu0
    %v903 = vadd.f32 0.0, %v902
    %904 = vmatmul.f32.gmra.mxu0 %v865
    %v905 = vpop.f32.mrf.mxu0
    %v906 = vadd.f32 0.0, %v905
    %907 = vdwg.mxu0
    %916 = vrot.lane.b32.xlu0 %v885, 124
    %v917 = vpop.permute.xlu0 %916
    %918 = vrot.lane.b32.xlu0 %v888, 124
    %v919 = vpop.permute.xlu0 %918
    %920 = vrot.lane.b32.xlu0 %v891, 124
    %v921 = vpop.permute.xlu0 %920
    %922 = vrot.lane.b32.xlu0 %v894, 124
    %v923 = vpop.permute.xlu0 %922
    %924 = vrot.lane.b32.xlu0 %v897, 124
    %v925 = vpop.permute.xlu0 %924
    %926 = vrot.lane.b32.xlu0 %v900, 124
    %v927 = vpop.permute.xlu0 %926
    %928 = vrot.lane.b32.xlu0 %v903, 124
    %v929 = vpop.permute.xlu0 %928
    %930 = vrot.lane.b32.xlu0 %v906, 124
    %v931 = vpop.permute.xlu0 %930
    %v940 = vrot.slane %v917, 1
    %v941 = vrot.slane %v919, 1
    %v942 = vrot.slane %v921, 1
    %v943 = vrot.slane %v923, 1
    %v944 = vrot.slane %v925, 1
    %v945 = vrot.slane %v927, 1
    %v946 = vrot.slane %v929, 1
    %v947 = vrot.slane %v931, 1
    %v948 = vsel %vm173, %v946, %v947
    %v949 = vsel %vm173, %v944, %v945
    %v950 = vsel %vm173, %v942, %v943
    %v951 = vsel %vm173, %v940, %v941
    %v952 = vadd.f32 %v885, %v951
    %v953 = vadd.f32 %v891, %v950
    %v954 = vadd.f32 %v897, %v949
    %v955 = vadd.f32 %v903, %v948
    %956 = vrot.lane.b32.xlu0 %v885, 120
    %v957 = vpop.permute.xlu0 %956
    %958 = vrot.lane.b32.xlu0 %v888, 120
    %v959 = vpop.permute.xlu0 %958
    %960 = vrot.lane.b32.xlu0 %v891, 120
    %v961 = vpop.permute.xlu0 %960
    %962 = vrot.lane.b32.xlu0 %v894, 120
    %v963 = vpop.permute.xlu0 %962
    %964 = vrot.lane.b32.xlu0 %v897, 120
    %v965 = vpop.permute.xlu0 %964
    %966 = vrot.lane.b32.xlu0 %v900, 120
    %v967 = vpop.permute.xlu0 %966
    %968 = vrot.lane.b32.xlu0 %v903, 120
    %v969 = vpop.permute.xlu0 %968
    %970 = vrot.lane.b32.xlu0 %v906, 120
    %v971 = vpop.permute.xlu0 %970
    %v980 = vrot.slane %v957, 2
    %v981 = vrot.slane %v959, 2
    %v982 = vrot.slane %v961, 2
    %v983 = vrot.slane %v963, 2
    %v984 = vrot.slane %v965, 2
    %v985 = vrot.slane %v967, 2
    %v986 = vrot.slane %v969, 2
    %v987 = vrot.slane %v971, 2
    %v988 = vsel %vm222, %v986, %v987
    %v989 = vsel %vm222, %v984, %v985
    %v990 = vsel %vm222, %v982, %v983
    %v991 = vsel %vm222, %v980, %v981
    %v992 = vadd.f32 %v952, %v991
    %v993 = vadd.f32 %v953, %v990
    %v994 = vadd.f32 %v954, %v989
    %v995 = vadd.f32 %v955, %v988
    %996 = vrot.lane.b32.xlu0 %v885, 116
    %v997 = vpop.permute.xlu0 %996
    %998 = vrot.lane.b32.xlu0 %v888, 116
    %v999 = vpop.permute.xlu0 %998
    %1000 = vrot.lane.b32.xlu0 %v891, 116
    %v1001 = vpop.permute.xlu0 %1000
    %1002 = vrot.lane.b32.xlu0 %v894, 116
    %v1003 = vpop.permute.xlu0 %1002
    %1004 = vrot.lane.b32.xlu0 %v897, 116
    %v1005 = vpop.permute.xlu0 %1004
    %1006 = vrot.lane.b32.xlu0 %v900, 116
    %v1007 = vpop.permute.xlu0 %1006
    %1008 = vrot.lane.b32.xlu0 %v903, 116
    %v1009 = vpop.permute.xlu0 %1008
    %1010 = vrot.lane.b32.xlu0 %v906, 116
    %v1011 = vpop.permute.xlu0 %1010
    %v1020 = vrot.slane %v997, 3
    %v1021 = vrot.slane %v999, 3
    %v1022 = vrot.slane %v1001, 3
    %v1023 = vrot.slane %v1003, 3
    %v1024 = vrot.slane %v1005, 3
    %v1025 = vrot.slane %v1007, 3
    %v1026 = vrot.slane %v1009, 3
    %v1027 = vrot.slane %v1011, 3
    %vm1028 = vcmp.lt.s32.totalorder %v172, 5
    %v1029 = vsel %vm1028, %v1026, %v1027
    %v1030 = vsel %vm1028, %v1024, %v1025
    %v1031 = vsel %vm1028, %v1022, %v1023
    %v1032 = vsel %vm1028, %v1020, %v1021
    %v1033 = vadd.f32 %v992, %v1032
    %v1034 = vadd.f32 %v993, %v1031
    %v1035 = vadd.f32 %v994, %v1030
    %v1036 = vadd.f32 %v995, %v1029
    %1037 = vrot.lane.b32.xlu0 %v885, 112
    %v1038 = vpop.permute.xlu0 %1037
    %1039 = vrot.lane.b32.xlu0 %v888, 112
    %v1040 = vpop.permute.xlu0 %1039
    %1041 = vrot.lane.b32.xlu0 %v891, 112
    %v1042 = vpop.permute.xlu0 %1041
    %1043 = vrot.lane.b32.xlu0 %v894, 112
    %v1044 = vpop.permute.xlu0 %1043
    %1045 = vrot.lane.b32.xlu0 %v897, 112
    %v1046 = vpop.permute.xlu0 %1045
    %1047 = vrot.lane.b32.xlu0 %v900, 112
    %v1048 = vpop.permute.xlu0 %1047
    %1049 = vrot.lane.b32.xlu0 %v903, 112
    %v1050 = vpop.permute.xlu0 %1049
    %1051 = vrot.lane.b32.xlu0 %v906, 112
    %v1052 = vpop.permute.xlu0 %1051
    %v1061 = vrot.slane %v1038, 4
    %v1062 = vrot.slane %v1040, 4
    %v1063 = vrot.slane %v1042, 4
    %v1064 = vrot.slane %v1044, 4
    %v1065 = vrot.slane %v1046, 4
    %v1066 = vrot.slane %v1048, 4
    %v1067 = vrot.slane %v1050, 4
    %v1068 = vrot.slane %v1052, 4
    %vm1069 = vcmp.lt.s32.totalorder %v172, 4
    %v1070 = vsel %vm1069, %v1067, %v1068
    %v1071 = vsel %vm1069, %v1065, %v1066
    %v1072 = vsel %vm1069, %v1063, %v1064
    %v1073 = vsel %vm1069, %v1061, %v1062
    %v1074 = vadd.f32 %v1033, %v1073
    %v1075 = vadd.f32 %v1034, %v1072
    %v1076 = vadd.f32 %v1035, %v1071
    %v1077 = vadd.f32 %v1036, %v1070
    %1078 = vrot.lane.b32.xlu0 %v885, 108
    %v1079 = vpop.permute.xlu0 %1078
    %1080 = vrot.lane.b32.xlu0 %v888, 108
    %v1081 = vpop.permute.xlu0 %1080
    %1082 = vrot.lane.b32.xlu0 %v891, 108
    %v1083 = vpop.permute.xlu0 %1082
    %1084 = vrot.lane.b32.xlu0 %v894, 108
    %v1085 = vpop.permute.xlu0 %1084
    %1086 = vrot.lane.b32.xlu0 %v897, 108
    %v1087 = vpop.permute.xlu0 %1086
    %1088 = vrot.lane.b32.xlu0 %v900, 108
    %v1089 = vpop.permute.xlu0 %1088
    %1090 = vrot.lane.b32.xlu0 %v903, 108
    %v1091 = vpop.permute.xlu0 %1090
    %1092 = vrot.lane.b32.xlu0 %v906, 108
    %v1093 = vpop.permute.xlu0 %1092
    %v1102 = vrot.slane %v1079, 5
    %v1103 = vrot.slane %v1081, 5
    %v1104 = vrot.slane %v1083, 5
    %v1105 = vrot.slane %v1085, 5
    %v1106 = vrot.slane %v1087, 5
    %v1107 = vrot.slane %v1089, 5
    %v1108 = vrot.slane %v1091, 5
    %v1109 = vrot.slane %v1093, 5
    %vm1110 = vcmp.lt.s32.totalorder %v172, 3
    %v1111 = vsel %vm1110, %v1108, %v1109
    %v1112 = vsel %vm1110, %v1106, %v1107
    %v1113 = vsel %vm1110, %v1104, %v1105
    %v1114 = vsel %vm1110, %v1102, %v1103
    %v1115 = vadd.f32 %v1074, %v1114
    %v1116 = vadd.f32 %v1075, %v1113
    %v1117 = vadd.f32 %v1076, %v1112
    %v1118 = vadd.f32 %v1077, %v1111
    %1119 = vrot.lane.b32.xlu0 %v885, 104
    %v1120 = vpop.permute.xlu0 %1119
    %1121 = vrot.lane.b32.xlu0 %v888, 104
    %v1122 = vpop.permute.xlu0 %1121
    %1123 = vrot.lane.b32.xlu0 %v891, 104
    %v1124 = vpop.permute.xlu0 %1123
    %1125 = vrot.lane.b32.xlu0 %v894, 104
    %v1126 = vpop.permute.xlu0 %1125
    %1127 = vrot.lane.b32.xlu0 %v897, 104
    %v1128 = vpop.permute.xlu0 %1127
    %1129 = vrot.lane.b32.xlu0 %v900, 104
    %v1130 = vpop.permute.xlu0 %1129
    %1131 = vrot.lane.b32.xlu0 %v903, 104
    %v1132 = vpop.permute.xlu0 %1131
    %1133 = vrot.lane.b32.xlu0 %v906, 104
    %v1134 = vpop.permute.xlu0 %1133
    %v1143 = vrot.slane %v1120, 6
    %v1144 = vrot.slane %v1122, 6
    %v1145 = vrot.slane %v1124, 6
    %v1146 = vrot.slane %v1126, 6
    %v1147 = vrot.slane %v1128, 6
    %v1148 = vrot.slane %v1130, 6
    %v1149 = vrot.slane %v1132, 6
    %v1150 = vrot.slane %v1134, 6
    %vm1151 = vcmp.lt.s32.totalorder %v172, 2
    %v1152 = vsel %vm1151, %v1149, %v1150
    %v1153 = vsel %vm1151, %v1147, %v1148
    %v1154 = vsel %vm1151, %v1145, %v1146
    %v1155 = vsel %vm1151, %v1143, %v1144
    %v1156 = vadd.f32 %v1115, %v1155
    %v1157 = vadd.f32 %v1116, %v1154
    %v1158 = vadd.f32 %v1117, %v1153
    %v1159 = vadd.f32 %v1118, %v1152
    %1160 = vrot.lane.b32.xlu0 %v885, 100
    %v1161 = vpop.permute.xlu0 %1160
    %1162 = vrot.lane.b32.xlu0 %v888, 100
    %v1163 = vpop.permute.xlu0 %1162
    %1164 = vrot.lane.b32.xlu0 %v891, 100
    %v1165 = vpop.permute.xlu0 %1164
    %1166 = vrot.lane.b32.xlu0 %v894, 100
    %v1167 = vpop.permute.xlu0 %1166
    %1168 = vrot.lane.b32.xlu0 %v897, 100
    %v1169 = vpop.permute.xlu0 %1168
    %1170 = vrot.lane.b32.xlu0 %v900, 100
    %v1171 = vpop.permute.xlu0 %1170
    %1172 = vrot.lane.b32.xlu0 %v903, 100
    %v1173 = vpop.permute.xlu0 %1172
    %1174 = vrot.lane.b32.xlu0 %v906, 100
    %v1175 = vpop.permute.xlu0 %1174
    %v1184 = vrot.slane %v1161, 7
    %v1185 = vrot.slane %v1163, 7
    %v1186 = vrot.slane %v1165, 7
    %v1187 = vrot.slane %v1167, 7
    %v1188 = vrot.slane %v1169, 7
    %v1189 = vrot.slane %v1171, 7
    %v1190 = vrot.slane %v1173, 7
    %v1191 = vrot.slane %v1175, 7
    %vm1192 = vcmp.lt.s32.totalorder %v172, 1
    %v1193 = vsel %vm1192, %v1190, %v1191
    %v1194 = vsel %vm1192, %v1188, %v1189
    %v1195 = vsel %vm1192, %v1186, %v1187
    %v1196 = vsel %vm1192, %v1184, %v1185
    %v1197 = vadd.f32 %v1156, %v1196
    %v1198 = vadd.f32 %v1157, %v1195
    %v1199 = vadd.f32 %v1158, %v1194
    %v1200 = vadd.f32 %v1159, %v1193
    %v1202 = vrot.slane %v1198, 7
    %v1205 = vrot.slane %v1199, 6
    %v1208 = vrot.slane %v1200, 5
    %vm1210 = vcmask 1040384
    %v1211 = vsel %vm1210, %v1197, %v1202
    %vm1212 = vcmask 1041408
    %v1213 = vsel %vm1212, %v1211, %v1205
    %vm1214 = vcmask 1042432
    %v1215 = vsel %vm1214, %v1213, %v1208
    %v1216 = vld [vmem:[%s10] sm:$0x1]
    %v1218 = vperm.slane %v1216, 0
    %v1220 = vadd.f32 %v1215, %v1218
    %vm1221 = vcmask 31744
    %v1222 = vsel %vm1221, %v1220, 0.0
    %1223 = vst [vmem:[#allocation7] sm:$0xf] %v1222
    // Predicated region
    $region54: #{tpu_custom_call.1} parent=1 // pred_check
      _
    $region55: #{tpu_custom_call.1} parent=1 // pred_check_branch
      %1225 = sbr.rel (0) target = $region57
    $region56: #{tpu_custom_call.1} parent=1 // pred_region
      %1227 = vsyncadd [#allocation4], 0
      %s1229 = sshll.u32 [#allocation7], 4
      %s1230 = int_to_ptr.vmem [resolvable:$true] %s1229
      %s1231 = sshll.u32 %s11, 4
      %s1232 = int_to_ptr.hbm [resolvable:$true] %s1231
      %1234 = dma.vmem_to_hbm [thread:$0]  %s1230, 64, %s1232, [#allocation4]
    $region57: #{tpu_custom_call.1} parent=1 // pred_fallthru
      _
    // Predicated region
    $region58: #{tpu_custom_call.1} parent=1 // pred_check
      _
    $region59: #{tpu_custom_call.1} parent=1 // pred_check_branch
      %1236 = sbr.rel (0) target = $region61
    $region60: #{tpu_custom_call.1} parent=1 // pred_region
      %1238 = dma.done [#allocation4], 64
    $region61: #{tpu_custom_call.1} parent=1 // pred_fallthru
      _
    %1239 = vsyncpa [#allocation3], 1
    %1240 = vsyncpa [#allocation6], 1
    %1241 = vsyncpa [#allocation4], 1

</llo_original>
